<compile_context>
chip_gen: v5e
topology: v5e:2x2
jax: 0.10.0
libtpu: 0.0.40
codegen_flags: <defaults>
</compile_context>

<pallas_src>
import functools

import jax
import jax.numpy as jnp
from jax.experimental import pallas as pl
from jax.experimental.pallas import tpu as pltpu


# --------------------------- VMEM / tiling helpers --------------------------


def _vmem_budget():
    """(tile_budget_bytes, vmem_limit_bytes) sized per TPU generation."""
    try:
        cap = int(pltpu.get_tpu_info().vmem_capacity_bytes)
    except Exception:
        cap = 64 << 20  # conservative fallback (v7x per-TensorCore VMEM)
    tile_budget = min(cap // 2, 48 << 20)        # double-buffered tiles
    vmem_limit = min(cap, tile_budget + (16 << 20))
    return tile_budget, vmem_limit


def _choose_tile_r(r, bytes_per_row, budget, fixed_bytes=0):
    """Row-tile size: multiple of 8, fits `budget`, and leaves the grid with
    several steps so megacore row-splitting + DMA/compute overlap stay useful."""
    avail = max(budget - fixed_bytes, 1 << 20)
    tile = avail // max(int(bytes_per_row), 1)
    tile = (tile // 8) * 8
    rows_cap = ((r + 7) // 8) * 8                       # no point beyond R
    steps_cap = ((((r + 7) // 8) + 7) // 8) * 8         # aim for >= ~8 grid steps
    return int(max(8, min(tile, steps_cap, rows_cap)))


def _choose_tn(n):
    """Lane-dense output-column tile for the fused path."""
    if n % 128 != 0:
        return n  # full extent (allowed); TODO(synk): pad non-128-multiple hidden sizes
    for cand in (512, 256, 128):
        if n % cand == 0:
            return cand
    return n


# ----------------------------- kernel bodies --------------------------------


def _layernorm_kernel(x_ref, a_ref, b_ref, o_ref, *, eps):
    x = x_ref[...].astype(jnp.float32)                     # (TILE_R, H)
    h = x.shape[-1]
    # One-pass statistics: sum and sum-of-squares from the same loaded tile.
    s1 = jnp.sum(x, axis=-1, keepdims=True)
    s2 = jnp.sum(x * x, axis=-1, keepdims=True)
    mean = s1 * (1.0 / h)
    var = (s2 - s1 * mean) * (1.0 / (h - 1))               # unbiased (torch.std)
    std = jnp.sqrt(jnp.maximum(var, 0.0))
    inv = pl.reciprocal(std + eps, approx=True)             # EUP slot
    y = (x - mean) * (a_ref[...].astype(jnp.float32) * inv) + b_ref[...].astype(jnp.float32)
    o_ref[...] = y.astype(o_ref.dtype)


def _residual_dropout_kernel(x_ref, y_ref, *rest, p, train):
    if train:
        u_ref, o_ref = rest
        keep = u_ref[...] >= p                               # P(keep) = 1 - p
        scale = jnp.asarray(1.0 / (1.0 - p), dtype=y_ref.dtype)
        y = jnp.where(keep, y_ref[...] * scale, jnp.zeros((), y_ref.dtype))
        o_ref[...] = (x_ref[...] + y).astype(o_ref.dtype)
    else:
        (o_ref,) = rest
        o_ref[...] = (x_ref[...] + y_ref[...]).astype(o_ref.dtype)


def _fused_kernel(x_ref, a_ref, b_ref, w_ref, xr_ref, *rest, eps, p, train):
    """LayerNorm -> (normed @ W) -> dropout -> + residual, all in one kernel.

    Grid = (row tiles, output-column tiles); the LN result for the current row
    tile is computed once (j == 0) into a VMEM scratch and reused for every
    output-column tile, so x is read once and 'normed'/'y' never touch HBM.
    """
    if train:
        u_ref, o_ref, n_scr = rest
    else:
        o_ref, n_scr = rest

    @pl.when(pl.program_id(1) == 0)
    def _():
        x = x_ref[...].astype(jnp.float32)                  # (TILE_R, H)
        h = x.shape[-1]
        s1 = jnp.sum(x, axis=-1, keepdims=True)
        s2 = jnp.sum(x * x, axis=-1, keepdims=True)
        mean = s1 * (1.0 / h)
        var = (s2 - s1 * mean) * (1.0 / (h - 1))
        std = jnp.sqrt(jnp.maximum(var, 0.0))
        inv = pl.reciprocal(std + eps, approx=True)
        n_scr[...] = (x - mean) * (a_ref[...].astype(jnp.float32) * inv) \
                     + b_ref[...].astype(jnp.float32)

    # MXU matmul in the weight dtype (bf16-friendly), f32 accumulation.
    y = jnp.dot(n_scr[...].astype(w_ref.dtype), w_ref[...],
                preferred_element_type=jnp.float32)          # (TILE_R, TN)
    if train:
        keep = u_ref[...] >= p
        y = jnp.where(keep, y * (1.0 / (1.0 - p)), 0.0)
    o_ref[...] = (xr_ref[...].astype(jnp.float32) + y).astype(o_ref.dtype)


# ----------------------------- pallas_call wrappers --------------------------


def layernorm_pallas(x2d, a_2, b_2, eps, *, out_dtype=None, tile_r=None):
    r, h = x2d.shape
    out_dtype = x2d.dtype if out_dtype is None else jnp.dtype(out_dtype)
    budget, vmem_limit = _vmem_budget()
    # double-buffered x + out tiles, plus in-kernel f32 working copies
    bpr = 2 * h * (x2d.dtype.itemsize + jnp.dtype(out_dtype).itemsize) + 2 * h * 4
    if tile_r is None:
        tile_r = _choose_tile_r(r, bpr, budget)
    return pl.pallas_call(
        functools.partial(_layernorm_kernel, eps=float(eps)),
        out_shape=jax.ShapeDtypeStruct((r, h), out_dtype),
        grid=(pl.cdiv(r, tile_r),),
        in_specs=[
            pl.BlockSpec((tile_r, h), lambda i: (i, 0)),
            pl.BlockSpec((1, h), lambda i: (0, 0)),   # a_2 resident across grid
            pl.BlockSpec((1, h), lambda i: (0, 0)),   # b_2 resident across grid
        ],
        out_specs=pl.BlockSpec((tile_r, h), lambda i: (i, 0)),
        compiler_params=pltpu.CompilerParams(
            dimension_semantics=("parallel",), vmem_limit_bytes=vmem_limit),
    )(x2d, a_2.reshape(1, h), b_2.reshape(1, h))


def residual_dropout_pallas(x2d, y2d, *, p, training, u2d=None, tile_r=None):
    r, h = x2d.shape
    train = bool(training) and 0.0 < p < 1.0
    budget, vmem_limit = _vmem_budget()
    bpr = 2 * 3 * h * x2d.dtype.itemsize + (2 * h * 4 if train else 0)
    if tile_r is None:
        tile_r = _choose_tile_r(r, bpr, budget)

    in_specs = [pl.BlockSpec((tile_r, h), lambda i: (i, 0)),
                pl.BlockSpec((tile_r, h), lambda i: (i, 0))]
    args = [x2d, y2d]
    if train:
        in_specs.append(pl.BlockSpec((tile_r, h), lambda i: (i, 0)))
        args.append(u2d)

    return pl.pallas_call(
        functools.partial(_residual_dropout_kernel, p=float(p), train=train),
        out_shape=jax.ShapeDtypeStruct((r, h), x2d.dtype),
        grid=(pl.cdiv(r, tile_r),),
        in_specs=in_specs,
        out_specs=pl.BlockSpec((tile_r, h), lambda i: (i, 0)),
        compiler_params=pltpu.CompilerParams(
            dimension_semantics=("parallel",), vmem_limit_bytes=vmem_limit),
    )(*args)


def fused_ln_linear_residual_dropout_pallas(x2d, w, a_2, b_2, *, eps, p,
                                            training, u2d=None, tile_r=None):
    """Fused x + dropout(LayerNorm(x) @ W) for the linear-sublayer fast path."""
    r, h = x2d.shape
    h_w, n = w.shape
    assert h_w == h and n == h, "residual connection needs a size-preserving sublayer"
    train = bool(training) and 0.0 < p < 1.0
    tn = _choose_tn(n)
    budget, vmem_limit = _vmem_budget()
    itemsize = x2d.dtype.itemsize
    # per-row: x tile (db) + f32 LN scratch + residual/out col tiles (db) + u + f32 temps
    bpr = (2 * h * itemsize + h * 4 + 4 * tn * itemsize
           + 2 * tn * 4 + (2 * tn * 4 if train else 0))
    fixed = 2 * h * tn * w.dtype.itemsize                   # double-buffered W tile
    if tile_r is None:
        tile_r = _choose_tile_r(r, bpr, budget, fixed_bytes=fixed)
    grid = (pl.cdiv(r, tile_r), pl.cdiv(n, tn))

    in_specs = [
        pl.BlockSpec((tile_r, h), lambda i, j: (i, 0)),      # x full row (LN input)
        pl.BlockSpec((1, h), lambda i, j: (0, 0)),           # a_2 (resident)
        pl.BlockSpec((1, h), lambda i, j: (0, 0)),           # b_2 (resident)
        pl.BlockSpec((h, tn), lambda i, j: (0, j)),          # W column tile
        pl.BlockSpec((tile_r, tn), lambda i, j: (i, j)),     # x residual columns
    ]
    args = [x2d, a_2.reshape(1, h), b_2.reshape(1, h), w, x2d]
    if train:
        in_specs.append(pl.BlockSpec((tile_r, tn), lambda i, j: (i, j)))
        args.append(u2d)

    return pl.pallas_call(
        functools.partial(_fused_kernel, eps=float(eps), p=float(p), train=train),
        out_shape=jax.ShapeDtypeStruct((r, n), x2d.dtype),
        grid=grid,
        in_specs=in_specs,
        out_specs=pl.BlockSpec((tile_r, tn), lambda i, j: (i, j)),
        scratch_shapes=[pltpu.VMEM((tile_r, h), jnp.float32)],   # LN result, reused per j
        compiler_params=pltpu.CompilerParams(
            dimension_semantics=("parallel", "arbitrary"),        # j reuses the LN scratch
            vmem_limit_bytes=vmem_limit),
    )(*args)


# ------------------------------ module wrapper --------------------------------


class SublayerConnectionPallas:
    """x + dropout(sublayer(LayerNorm(x))).

    * sublayer_weight given  -> fully fused single-kernel path (LN+matmul+dropout+residual).
    * sublayer callable given -> LN kernel -> arbitrary JAX callable -> residual/dropout kernel.
    """

    def __init__(self, size, dropout, eps=1e-6):
        self.a_2 = jnp.ones((size,), jnp.float32)    # nn.Parameter(ones)
        self.b_2 = jnp.zeros((size,), jnp.float32)   # nn.Parameter(zeros)
        self.eps = float(eps)
        self.p = float(dropout)

    def __call__(self, x, sublayer=None, *, sublayer_weight=None,
                 training=False, rng_key=None):
        b, s, h = x.shape
        r = b * s
        x2 = x.reshape(r, h)

        if training and self.p >= 1.0:
            return x                                  # everything dropped -> residual only

        train = bool(training) and self.p > 0.0
        u2 = None
        if train:
            if rng_key is None:
                rng_key = jax.random.PRNGKey(0)
            # Host-side dropout randomness (portable: no TPU-only PRNG primitives).
            u2 = jax.random.uniform(rng_key, (r, h), jnp.float32)

        if sublayer_weight is not None:
            out2 = fused_ln_linear_residual_dropout_pallas(
                x2, sublayer_weight, self.a_2, self.b_2,
                eps=self.eps, p=self.p, training=train, u2d=u2)
        else:
            normed = layernorm_pallas(x2, self.a_2, self.b_2, self.eps)
            y = sublayer(normed.reshape(b, s, h))     # arbitrary JAX callable (glue)
            out2 = residual_dropout_pallas(
                x2, y.reshape(r, h), p=self.p, training=train, u2d=u2)
        return out2.reshape(b, s, h)


# ------------------------------------ demo ------------------------------------


if __name__ == "__main__":
    key = jax.random.PRNGKey(0)
    k_x, k_w, k_drop = jax.random.split(key, 3)

    batch, seq, hidden = 2, 8, 128                    # lane-dense last dim
    x = jax.random.normal(k_x, (batch, seq, hidden), dtype=jnp.float32)

    # Example sublayer: a size-preserving linear layer.
    w = jax.random.normal(k_w, (hidden, hidden), dtype=jnp.float32) * 0.02
    sublayer = lambda h_in: jnp.einsum("bsh,hd->bsd", h_in, w)

    module = SublayerConnectionPallas(size=hidden, dropout=0.1)

    # pure-JAX reference (exact semantics of the PyTorch module, eval mode)
    mean = jnp.mean(x, axis=-1, keepdims=True)
    std = jnp.std(x, axis=-1, keepdims=True, ddof=1)   # unbiased, eps added to std
    normed_ref = module.a_2 * (x - mean) / (std + module.eps) + module.b_2
    y_ref = sublayer(normed_ref)
    ref_eval = x + y_ref

    # 1) generic-callable path, eval (dropout = identity)
    out_eval = jax.block_until_ready(module(x, sublayer, training=False))
    assert jnp.allclose(out_eval, ref_eval, atol=5e-3, rtol=5e-3), "generic eval mismatch"

    # 2) fused single-kernel path, eval
    out_eval_f = jax.block_until_ready(module(x, sublayer_weight=w, training=False))
    assert jnp.allclose(out_eval_f, ref_eval, atol=5e-3, rtol=5e-3), "fused eval mismatch"

    # 3) training mode: each element is either x (dropped) or x + y/(1-p);
    #    fused and generic paths share the same host-generated mask.
    out_tr = jax.block_until_ready(module(x, sublayer, training=True, rng_key=k_drop))
    out_tr_f = jax.block_until_ready(module(x, sublayer_weight=w, training=True, rng_key=k_drop))
    scale = 1.0 / (1.0 - module.p)
    dropped = jnp.isclose(out_tr, x, atol=5e-3, rtol=5e-3)
    kept = jnp.isclose(out_tr, x + y_ref * scale, atol=5e-3, rtol=5e-3)
    assert bool(jnp.all(dropped | kept)), "training-mode dropout mismatch"
    assert jnp.allclose(out_tr, out_tr_f, atol=5e-3, rtol=5e-3), "fused vs generic training mismatch"

    print("KERNEL_OK")
</pallas_src>

<mosaic_0001>
module attributes {stable_mosaic.version = 11 : i64} {
  func.func @_layernorm_kernel(%arg0: i32, %arg1: memref<8x128xf32, #tpu.memory_space<vmem>>, %arg2: memref<1x128xf32, #tpu.memory_space<vmem>>, %arg3: memref<1x128xf32, #tpu.memory_space<vmem>>, %arg4: memref<8x128xf32, #tpu.memory_space<vmem>>) attributes {dimension_semantics = [#tpu.dimension_semantics<parallel>], iteration_bounds = array<i64: 2>, scalar_prefetch = 0 : i64, scratch_operands = 0 : i64, tpu.core_type = #tpu.core_type<tc>, window_params = [{transform_indices = @transform_0, window_bounds = array<i64: 8, 128>}, {pipeline_mode = #tpu.pipeline_mode<synchronous>, transform_indices = @transform_1, window_bounds = array<i64: 1, 128>}, {pipeline_mode = #tpu.pipeline_mode<synchronous>, transform_indices = @transform_2, window_bounds = array<i64: 1, 128>}, {transform_indices = @transform_3, window_bounds = array<i64: 8, 128>}]} {
    %c0 = arith.constant 0 : index
    %c0_0 = arith.constant 0 : index
    %0 = vector.load %arg1[%c0, %c0_0] : memref<8x128xf32, #tpu.memory_space<vmem>>, vector<8x128xf32>
    %cst = arith.constant dense<0.000000e+00> : vector<8xf32>
    %1 = vector.multi_reduction <add>, %0, %cst [1] : vector<8x128xf32> to vector<8xf32>
    %2 = vector.shape_cast %1 : vector<8xf32> to vector<8x1xf32>
    %3 = arith.mulf %0, %0 : vector<8x128xf32>
    %cst_1 = arith.constant dense<0.000000e+00> : vector<8xf32>
    %4 = vector.multi_reduction <add>, %3, %cst_1 [1] : vector<8x128xf32> to vector<8xf32>
    %5 = vector.shape_cast %4 : vector<8xf32> to vector<8x1xf32>
    %cst_2 = arith.constant 7.812500e-03 : f32
    %6 = vector.broadcast %cst_2 : f32 to vector<8x1xf32>
    %7 = arith.mulf %2, %6 : vector<8x1xf32>
    %8 = arith.mulf %2, %7 : vector<8x1xf32>
    %9 = arith.subf %5, %8 : vector<8x1xf32>
    %cst_3 = arith.constant 0.00787401571 : f32
    %10 = vector.broadcast %cst_3 : f32 to vector<8x1xf32>
    %11 = arith.mulf %9, %10 : vector<8x1xf32>
    %cst_4 = arith.constant 0.000000e+00 : f32
    %12 = vector.broadcast %cst_4 : f32 to vector<8x1xf32>
    %13 = arith.maximumf %11, %12 : vector<8x1xf32>
    %14 = math.sqrt %13 : vector<8x1xf32>
    %cst_5 = arith.constant 9.99999997E-7 : f32
    %15 = vector.broadcast %cst_5 : f32 to vector<8x1xf32>
    %16 = arith.addf %14, %15 : vector<8x1xf32>
    %17 = tpu.reciprocal %16 {approx = true} : vector<8x1xf32> -> vector<8x1xf32>
    %18 = vector.broadcast %7 : vector<8x1xf32> to vector<8x128xf32>
    %19 = arith.subf %0, %18 : vector<8x128xf32>
    %c0_6 = arith.constant 0 : index
    %c0_7 = arith.constant 0 : index
    %20 = vector.load %arg2[%c0_6, %c0_7] : memref<1x128xf32, #tpu.memory_space<vmem>>, vector<1x128xf32>
    %21 = vector.broadcast %20 : vector<1x128xf32> to vector<8x128xf32>
    %22 = vector.broadcast %17 : vector<8x1xf32> to vector<8x128xf32>
    %23 = arith.mulf %21, %22 : vector<8x128xf32>
    %24 = arith.mulf %19, %23 : vector<8x128xf32>
    %c0_8 = arith.constant 0 : index
    %c0_9 = arith.constant 0 : index
    %25 = vector.load %arg3[%c0_8, %c0_9] : memref<1x128xf32, #tpu.memory_space<vmem>>, vector<1x128xf32>
    %26 = vector.broadcast %25 : vector<1x128xf32> to vector<8x128xf32>
    %27 = arith.addf %24, %26 : vector<8x128xf32>
    %c0_10 = arith.constant 0 : index
    %c0_11 = arith.constant 0 : index
    %28 = vector.load %arg4[%c0_10, %c0_11] : memref<8x128xf32, #tpu.memory_space<vmem>>, vector<8x128xf32>
    tpu.vector_store %arg4[%c0_10, %c0_11], %27 {strides = array<i32>} : memref<8x128xf32, #tpu.memory_space<vmem>>, vector<8x128xf32>,
    return
  }
  func.func @transform_0(%arg0: i32) -> (i32, i32) {
    %c0_i32 = arith.constant 0 : i32
    %c0_i32_0 = arith.constant 0 : i32
    return %arg0, %c0_i32 : i32, i32
  }
  func.func @transform_1(%arg0: i32) -> (i32, i32) {
    %c0_i32 = arith.constant 0 : i32
    %c0_i32_0 = arith.constant 0 : i32
    %c0_i32_1 = arith.constant 0 : i32
    return %c0_i32, %c0_i32_0 : i32, i32
  }
  func.func @transform_2(%arg0: i32) -> (i32, i32) {
    %c0_i32 = arith.constant 0 : i32
    %c0_i32_0 = arith.constant 0 : i32
    %c0_i32_1 = arith.constant 0 : i32
    return %c0_i32, %c0_i32_0 : i32, i32
  }
  func.func @transform_3(%arg0: i32) -> (i32, i32) {
    %c0_i32 = arith.constant 0 : i32
    %c0_i32_0 = arith.constant 0 : i32
    return %arg0, %c0_i32 : i32, i32
  }
}

</mosaic_0001>

<llo_original>
// kernel: tpu_custom_call.1
$region0: #{tpu_custom_call.1}
  #allocation0 [shape = 'u32[]', space=smem, size = 0x4, offset = 0x4, fixed_abs, tag = 'smem constant byte address 0x4 - core index']
  #allocation1 [shape = 'u32[72,128]{1,0:T(1,128)}', space=vmem, size = 0x9000, scoped, tag = 'internal scratch']
  %s0 = inlined_call_operand.hbm [shape: f32[16,128], index: 0, kind: input, shape index: {}]
  %s1 = inlined_call_operand.hbm [shape: f32[1,128], index: 1, kind: input, shape index: {}]
  %s2 = inlined_call_operand.vmem [shape: f32[1,128], index: 2, kind: input, shape index: {}]
  %s3 = inlined_call_operand.hbm [shape: f32[16,128], index: 3, kind: output, shape index: {}]
  %s4 = sld [smem:[#allocation0]]
  $region53: #{tpu_custom_call.1} parent=0
    _
  %s6 = ssub.s32 1, %s4
  %s7 = scalar_select 0, %s6, %s4
  $region1: #{tpu_custom_call.1} parent=0
    #allocation2 [shape = 'u8[8192]{0}', space=vmem, size = 0x2000, scoped, tag = 'input window, operand 0']
    #allocation3 [shape = 's32[2]{0}', space=sflag, size = 0x8, scoped, tag = 'scoped memory for tpu_custom_call.1']
    #allocation4 [shape = 's32[2]{0}', space=sflag, size = 0x8, scoped, tag = 'scoped memory for tpu_custom_call.1']
    #allocation5 [shape = 'u8[512]{0}', space=vmem, size = 0x400, scoped, tag = 'input window, operand 1, single buffered']
    #allocation6 [shape = 's32[1]{0}', space=sflag, size = 0x4, scoped, tag = 'scoped memory for tpu_custom_call.1']
    #allocation7 [shape = 'u8[8192]{0}', space=vmem, size = 0x2000, scoped, tag = 'output window, operand 0']
    %8 = vsyncpa [#allocation3], 0
    %s9 = scalar_lea.sflag [#allocation3], 1
    %10 = vsyncpa %s9, 0
    %11 = vsyncpa [#allocation6], 0
    %12 = vsyncpa [#allocation4], 0
    %s13 = scalar_lea.sflag [#allocation4], 1
    %14 = vsyncpa %s13, 0
    loop: start=0, step=1, limit=4
    $region2: #{tpu_custom_call.1} parent=1 // loop_pre_header
      _
    $region3: #{tpu_custom_call.1} parent=1 // loop_header
      %s16 = sphi 0, %s20
      %p17 = scmp.ge.s32.totalorder %s16, 4
      %s26 = sphi 0, %s28
      %s29 = sphi 0, %s26
      %s30 = sphi 0, %s29
      %s46 = sphi 0, %s30
      %s50 = sphi 0, %s50
      %s52 = sphi 0, %s50
      %s53 = sphi 0, %s52
      %s67 = sphi 0, %s53
      %s71 = sphi 0, %s71
      %s73 = sphi 0, %s71
      %s74 = sphi 0, %s73
      %s88 = sphi 0, %s74
      %s94 = sphi 0, %s96
      %s97 = sphi 0, %s94
      %s98 = sphi 0, %s97
      %s114 = sphi 0, %s98
    $region4: #{tpu_custom_call.1} parent=1 // loop_header_branch
      %19 = sbr.rel (%p17) target = $region8
    $region5: #{tpu_custom_call.1} parent=1 // loop_body
      %s21 = ssub.s32 %s16, 1
      %s22 = ssub.s32 %s16, 2
      %s23 = sadd.s32 %s16, 1
      %s24 = ssub.s32 %s16, %s23
      %p25 = scmp.eq.s32.totalorder %s24, 0
      %s27 = sadd.s32 %s26, 1
      %s28 = scalar_select %p25, %s26, %s27
      %p31 = pneg %p25
      %p32 = scmp.eq.s32.totalorder %s16, 1
      %p33 = por %p31, %p32
      %p34 = scmp.ne.s32.totalorder %s26, %s29
      %p35 = scmp.eq.s32.totalorder %s16, 0
      %p36 = por %p34, %p35
      %p37 = scmp.ne.s32.totalorder %s26, %s29
      %p38 = scmp.eq.s32.totalorder %s21, 1
      %p39 = por %p37, %p38
      %p40 = scmp.ne.s32.totalorder %s29, %s30
      %p41 = scmp.eq.s32.totalorder %s21, 0
      %p42 = por %p40, %p41
      %p43 = scmp.ne.s32.totalorder %s29, %s30
      %p44 = scmp.eq.s32.totalorder %s22, 1
      %p45 = por %p43, %p44
      %p47 = scmp.ne.s32.totalorder %s30, %s46
      %p48 = scmp.eq.s32.totalorder %s22, 0
      %p49 = por %p47, %p48
      %s51 = sadd.s32 %s50, 1
      %p54 = scmp.eq.s32.totalorder %s16, 1
      %p55 = scmp.ne.s32.totalorder %s50, %s52
      %p56 = scmp.eq.s32.totalorder %s16, 0
      %p57 = por %p55, %p56
      %p58 = scmp.ne.s32.totalorder %s50, %s52
      %p59 = scmp.eq.s32.totalorder %s21, 1
      %p60 = por %p58, %p59
      %p61 = scmp.ne.s32.totalorder %s52, %s53
      %p62 = scmp.eq.s32.totalorder %s21, 0
      %p63 = por %p61, %p62
      %p64 = scmp.ne.s32.totalorder %s52, %s53
      %p65 = scmp.eq.s32.totalorder %s22, 1
      %p66 = por %p64, %p65
      %p68 = scmp.ne.s32.totalorder %s53, %s67
      %p69 = scmp.eq.s32.totalorder %s22, 0
      %p70 = por %p68, %p69
      %s72 = sadd.s32 %s71, 1
      %p75 = scmp.eq.s32.totalorder %s16, 1
      %p76 = scmp.ne.s32.totalorder %s71, %s73
      %p77 = scmp.eq.s32.totalorder %s16, 0
      %p78 = por %p76, %p77
      %p79 = scmp.ne.s32.totalorder %s71, %s73
      %p80 = scmp.eq.s32.totalorder %s21, 1
      %p81 = por %p79, %p80
      %p82 = scmp.ne.s32.totalorder %s73, %s74
      %p83 = scmp.eq.s32.totalorder %s21, 0
      %p84 = por %p82, %p83
      %p85 = scmp.ne.s32.totalorder %s73, %s74
      %p86 = scmp.eq.s32.totalorder %s22, 1
      %p87 = por %p85, %p86
      %p89 = scmp.ne.s32.totalorder %s74, %s88
      %p90 = scmp.eq.s32.totalorder %s22, 0
      %p91 = por %p89, %p90
      %s92 = ssub.s32 %s16, %s23
      %p93 = scmp.eq.s32.totalorder %s92, 0
      %s95 = sadd.s32 %s94, 1
      %s96 = scalar_select %p93, %s94, %s95
      %p99 = pneg %p93
      %p100 = scmp.eq.s32.totalorder %s16, 1
      %p101 = por %p99, %p100
      %p102 = scmp.ne.s32.totalorder %s94, %s97
      %p103 = scmp.eq.s32.totalorder %s16, 0
      %p104 = por %p102, %p103
      %p105 = scmp.ne.s32.totalorder %s94, %s97
      %p106 = scmp.eq.s32.totalorder %s21, 1
      %p107 = por %p105, %p106
      %p108 = scmp.ne.s32.totalorder %s97, %s98
      %p109 = scmp.eq.s32.totalorder %s21, 0
      %p110 = por %p108, %p109
      %p111 = scmp.ne.s32.totalorder %s97, %s98
      %p112 = scmp.eq.s32.totalorder %s22, 1
      %p113 = por %p111, %p112
      %p115 = scmp.ne.s32.totalorder %s98, %s114
      %p116 = scmp.eq.s32.totalorder %s22, 0
      %p117 = por %p115, %p116
      %p118 = scmp.le.s32.totalorder 1, %s16
      %p119 = scmp.lt.s32.totalorder %s16, 3
      %p120 = pnand %p118, %p119
      %p121 = pneg %p120
      // Predicated region
      $region9: #{tpu_custom_call.1} parent=5 // pred_check
        _
      $region10: #{tpu_custom_call.1} parent=5 // pred_check_branch
        %123 = sbr.rel (%p120) target = $region12
      $region11: #{tpu_custom_call.1} parent=5 // pred_region
        %s124 = ssub.s32 %s16, 1
        // Predicated region
        $region13: #{tpu_custom_call.1} parent=11 // pred_check
          %p125 = pneg %p63
        $region14: #{tpu_custom_call.1} parent=11 // pred_check_branch
          %127 = sbr.rel (%p125) target = $region16
        $region15: #{tpu_custom_call.1} parent=11 // pred_region
          %129 = vsyncadd [#allocation6], 0
          %s131 = sshll.u32 %s1, 4
          %s132 = int_to_ptr.hbm [resolvable:$true] %s131
          %s133 = sshll.u32 [#allocation5], 4
          %s134 = int_to_ptr.vmem [resolvable:$true] %s133
          %136 = dma.hbm_to_vmem [thread:$0]  %s132, 16, %s134, [#allocation6]
        $region16: #{tpu_custom_call.1} parent=11 // pred_fallthru
          _
        // Predicated region
        $region17: #{tpu_custom_call.1} parent=11 // pred_check
          %p137 = pneg %p84
        $region18: #{tpu_custom_call.1} parent=11 // pred_check_branch
          %139 = sbr.rel (%p137) target = $region20
        $region19: #{tpu_custom_call.1} parent=11 // pred_region
          _
        $region20: #{tpu_custom_call.1} parent=11 // pred_fallthru
          _
      $region12: #{tpu_custom_call.1} parent=5 // pred_fallthru
        _
      %p140 = scmp.lt.s32.totalorder %s16, 2
      // Predicated region
      $region21: #{tpu_custom_call.1} parent=5 // pred_check
        %p141 = pneg %p140
      $region22: #{tpu_custom_call.1} parent=5 // pred_check_branch
        %143 = sbr.rel (%p141) target = $region24
      $region23: #{tpu_custom_call.1} parent=5 // pred_region
        // Predicated region
        $region25: #{tpu_custom_call.1} parent=23 // pred_check
          %p144 = pneg %p36
        $region26: #{tpu_custom_call.1} parent=23 // pred_check_branch
          %146 = sbr.rel (%p144) target = $region28
        $region27: #{tpu_custom_call.1} parent=23 // pred_region
          %s147 = sand.u32 %s26, 1
          %s148 = scalar_lea.sflag [#allocation3], %s147
          %s149 = sand.u32 %s26, 1
          %s150 = smul.addr %s149, 8
          %s151 = scalar_lea.vmem [#allocation2], %s150
          %153 = vsyncadd %s148, 0
          %s154 = smul.addr %s16, 8
          %s155 = scalar_lea.hbm %s0, %s154
          %s157 = sshll.u32 %s155, 4
          %s158 = int_to_ptr.hbm [resolvable:$true] %s157
          %s159 = sshll.u32 %s151, 4
          %s160 = int_to_ptr.vmem [resolvable:$true] %s159
          %162 = dma.hbm_to_vmem [thread:$0]  %s158, 128, %s160, %s148
        $region28: #{tpu_custom_call.1} parent=23 // pred_fallthru
          _
      $region24: #{tpu_custom_call.1} parent=5 // pred_fallthru
        _
      %p163 = scmp.le.s32.totalorder 1, %s16
      %p164 = scmp.lt.s32.totalorder %s16, 3
      %p165 = pnand %p163, %p164
      %p166 = pneg %p165
      // Predicated region
      $region29: #{tpu_custom_call.1} parent=5 // pred_check
        _
      $region30: #{tpu_custom_call.1} parent=5 // pred_check_branch
        %168 = sbr.rel (%p165) target = $region32
      $region31: #{tpu_custom_call.1} parent=5 // pred_region
        %s169 = ssub.s32 %s16, 1
        %s170 = sand.u32 %s29, 1
        %s171 = scalar_lea.sflag [#allocation3], %s170
        %s172 = sand.u32 %s29, 1
        %s173 = smul.addr %s172, 8
        %s174 = scalar_lea.vmem [#allocation2], %s173
        // Predicated region
        $region33: #{tpu_custom_call.1} parent=31 // pred_check
          %p175 = pneg %p42
        $region34: #{tpu_custom_call.1} parent=31 // pred_check_branch
          %177 = sbr.rel (%p175) target = $region36
        $region35: #{tpu_custom_call.1} parent=31 // pred_region
          %179 = dma.done %s171, 128
        $region36: #{tpu_custom_call.1} parent=31 // pred_fallthru
          _
        // Predicated region
        $region37: #{tpu_custom_call.1} parent=31 // pred_check
          %p180 = pneg %p63
        $region38: #{tpu_custom_call.1} parent=31 // pred_check_branch
          %182 = sbr.rel (%p180) target = $region40
        $region39: #{tpu_custom_call.1} parent=31 // pred_region
          %184 = dma.done [#allocation6], 16
        $region40: #{tpu_custom_call.1} parent=31 // pred_fallthru
          _
        %s185 = sand.u32 %s29, 1
        %s186 = scalar_lea.sflag [#allocation3], %s185
        %s187 = sand.u32 %s29, 1
        %s188 = smul.addr %s187, 8
        %s189 = scalar_lea.vmem [#allocation2], %s188
        %p190 = pneg %p42
        %p191 = pneg %p39
        %p192 = pneg %p63
        %p193 = pneg %p60
        %p194 = pneg %p84
        %p195 = pneg %p81
        %p196 = pneg %p110
        %p197 = pneg %p107
        %s198 = sand.u32 %s97, 1
        %s199 = scalar_lea.sflag [#allocation4], %s198
        %s200 = sand.u32 %s97, 1
        %s201 = smul.addr %s200, 8
        %s202 = scalar_lea.vmem [#allocation7], %s201
        %v203 = vld [vmem:[%s174] sm:$0xff]
        %204 = vadd.xlane.f32.xlu0 %v203
        %v205 = vpop.xlane.xlu0 %204
        %v206 = vmul.f32 %v203, %v203
        %207 = vadd.xlane.f32.xlu0 %v206
        %v208 = vpop.xlane.xlu0 %207
        %v209 = vmul.f32 %v205, 0.0078125
        %v210 = vmul.f32 %v205, %v209
        %v211 = vsub.f32 %v208, %v210
        %v212 = vmul.f32 %v211, 0.007874016
        %v213 = vmax.f32 %v212, 0.0
        %v214 = vrsqrt.pop %v213
        %v215 = vmul.f32 %v214, %v213
        %v216 = vmul.f32 %v215, %v214
        %v217 = vmul.f32 0.5, %v216
        %v218 = vsub.f32 1.5, %v217
        %v219 = vmul.f32 %v214, %v218
        %v220 = vmul.f32 %v213, %v219
        %vm221 = vcmp.eq.f32.partialorder %v213, inf
        %v222 = vsel %vm221, %v213, %v220
        %vm223 = vcmp.eq.f32.partialorder %v213, 0.0
        %v224 = vand.u32 %v213, 2147483648
        %v225 = vsel %vm223, %v224, %v222
        %v226 = vadd.f32 %v225, 1e-06
        %v227 = vrcp.pop %v226
        %v228 = vsub.f32 %v203, %v209
        %v229 = vld [vmem:[#allocation5] sm:$0x1]
        %v231 = vperm.slane %v229, 0
        %v233 = vmul.f32 %v231, %v227
        %v234 = vmul.f32 %v228, %v233
        %v235 = vld [vmem:[%s2] sm:$0x1]
        %v237 = vperm.slane %v235, 0
        %v239 = vadd.f32 %v234, %v237
        %240 = vst [vmem:[%s202] sm:$0xff] %v239
        %s241 = sand.u32 %s97, 1
        %s242 = scalar_lea.sflag [#allocation4], %s241
        %s243 = sand.u32 %s97, 1
        %s244 = smul.addr %s243, 8
        %s245 = scalar_lea.vmem [#allocation7], %s244
        // Predicated region
        $region41: #{tpu_custom_call.1} parent=31 // pred_check
          %p246 = pneg %p107
        $region42: #{tpu_custom_call.1} parent=31 // pred_check_branch
          %248 = sbr.rel (%p246) target = $region44
        $region43: #{tpu_custom_call.1} parent=31 // pred_region
          %250 = vsyncadd %s242, 0
          %s251 = smul.addr %s21, 8
          %s252 = scalar_lea.hbm %s3, %s251
          %s254 = sshll.u32 %s245, 4
          %s255 = int_to_ptr.vmem [resolvable:$true] %s254
          %s256 = sshll.u32 %s252, 4
          %s257 = int_to_ptr.hbm [resolvable:$true] %s256
          %259 = dma.vmem_to_hbm [thread:$0]  %s255, 128, %s257, %s242
        $region44: #{tpu_custom_call.1} parent=31 // pred_fallthru
          _
      $region32: #{tpu_custom_call.1} parent=5 // pred_fallthru
        _
      %p260 = scmp.le.s32.totalorder 2, %s16
      // Predicated region
      $region45: #{tpu_custom_call.1} parent=5 // pred_check
        %p261 = pneg %p260
      $region46: #{tpu_custom_call.1} parent=5 // pred_check_branch
        %263 = sbr.rel (%p261) target = $region48
      $region47: #{tpu_custom_call.1} parent=5 // pred_region
        %s264 = ssub.s32 %s16, 2
        // Predicated region
        $region49: #{tpu_custom_call.1} parent=47 // pred_check
          %p265 = pneg %p113
        $region50: #{tpu_custom_call.1} parent=47 // pred_check_branch
          %267 = sbr.rel (%p265) target = $region52
        $region51: #{tpu_custom_call.1} parent=47 // pred_region
          %s268 = sand.u32 %s98, 1
          %s269 = scalar_lea.sflag [#allocation4], %s268
          %s270 = sand.u32 %s98, 1
          %s271 = smul.addr %s270, 8
          %s272 = scalar_lea.vmem [#allocation7], %s271
          %274 = dma.done %s269, 128
        $region52: #{tpu_custom_call.1} parent=47 // pred_fallthru
          _
      $region48: #{tpu_custom_call.1} parent=5 // pred_fallthru
        _
    $region6: #{tpu_custom_call.1} parent=1 // loop_footer
      %s20 = sadd.s32 1, %s16
    $region7: #{tpu_custom_call.1} parent=1 // loop_footer_branch
      %15 = sbr.rel target = $region3
    $region8: #{tpu_custom_call.1} parent=1 // loop_exit
      _
    %275 = vsyncpa [#allocation3], 1
    %s276 = scalar_lea.sflag [#allocation3], 1
    %277 = vsyncpa %s276, 1
    %278 = vsyncpa [#allocation6], 1
    %279 = vsyncpa [#allocation4], 1
    %s280 = scalar_lea.sflag [#allocation4], 1
    %281 = vsyncpa %s280, 1

</llo_original>
